<compile_context>
chip_gen: v5e
topology: v5e:2x2
jax: 0.10.0
libtpu: 0.0.40
codegen_flags: <defaults>
</compile_context>

<pallas_src>
import jax
import jax.numpy as jnp
from jax.experimental import pallas as pl
from jax.experimental.pallas import tpu as pltpu

LEAKY_SLOPE = 0.2
_K_CHUNK = 8                      # neighbors gathered per batched matmul
_VMEM_LIMIT = 48 * 1024 * 1024    # headroom below v7x's 64 MiB physical VMEM


def _pad128(n):
    return ((n + 127) // 128) * 128


def _pick_tile(n, max_tile=128):
    """Query-point tile size: multiple of 8 dividing n, capped at max_tile."""
    if n <= max_tile:
        return n
    for t in range(max_tile, 7, -8):
        if n % t == 0:
            return t
    return n


# -----------------------------------------------------------------------------
# Pallas kernels
# -----------------------------------------------------------------------------
def _edge_conv_kernel(x_ref, idx_ref, wdif_ref, wbase_ref, shift_ref, out_ref,
                      p_ref, base_ref):
    """One EdgeConv block (conv1x1 + BN(eval) + max over K + LeakyReLU).

    Grid: (batch, point-tile).  Per batch element the full point set is
    projected once into VMEM scratch (p_ref in bf16, base_ref in f32); each
    point tile then only does batched one-hot gather matmuls + max.

    x_ref:     (1, N, Cin)    per-point features (full point set, resident)
    idx_ref:   (1, TN, K)     int32 neighbor indices (0..N-1) for this tile
    wdif_ref:  (Cin, Cout)    BN-scaled weight acting on x_j          (padded)
    wbase_ref: (Cin, Cout)    BN-scaled weight (W_cen - W_dif) on x_i (padded)
    shift_ref: (1, Cout)      folded BatchNorm shift                  (padded)
    out_ref:   (1, TN, Cout)  per-point output of this tile
    p_ref:     (N, Cout) bf16 scratch: x @ wdif
    base_ref:  (N, Cout) f32  scratch: x @ wbase + shift
    """
    t = pl.program_id(1)
    N = x_ref.shape[1]
    TN = idx_ref.shape[1]
    K = idx_ref.shape[2]

    # Project the whole point set once per batch element.
    @pl.when(t == 0)
    def _():
        x = x_ref[0]                                            # (N, Cin) f32
        p_ref[...] = jnp.dot(x, wdif_ref[...],
                             preferred_element_type=jnp.float32
                             ).astype(p_ref.dtype)
        base_ref[...] = (jnp.dot(x, wbase_ref[...],
                                 preferred_element_type=jnp.float32)
                         + shift_ref[...])

    idx = idx_ref[0]                                            # (TN, K) int32
    col = jax.lax.broadcasted_iota(jnp.int32, (TN, N), 1)
    p = p_ref[...]                                              # (N, Cout) bf16

    kc = min(K, _K_CHUNK)
    acc = None
    for k0 in range(0, K, kc):                 # static unroll over chunks
        kk = min(kc, K - k0)
        # Batched one-hot gather: one (kk*TN, N) bf16 matmul per chunk.
        onehot = jnp.concatenate(
            [(idx[:, j:j + 1] == col).astype(p.dtype)
             for j in range(k0, k0 + kk)], axis=0)              # (kk*TN, N)
        g = jnp.dot(onehot, p, preferred_element_type=jnp.float32)  # (kk*TN, Cout)
        for j in range(kk):                    # max over neighbors (VPU)
            blk = g[j * TN:(j + 1) * TN]
            acc = blk if acc is None else jnp.maximum(acc, blk)

    start = pl.multiple_of(t * TN, TN)
    y = acc + base_ref[pl.ds(start, TN), :]
    # LeakyReLU once, after the max (monotone => commutes with max).
    out_ref[0] = jnp.where(y > 0, y, LEAKY_SLOPE * y)


def _final_conv_kernel(*refs):
    """Final Conv1d(1x1) + BN1d(eval) + LeakyReLU with fused concat and a
    resident global-max accumulator across point tiles.

    refs = (x_0..x_{L-1}, w_0..w_{L-1}, shift, feat_out, glob_out)
      x_l:  (1, TN, Cpad_l)   layer-l per-point features for this tile
      w_l:  (Cpad_l, Lpad)    BN-scaled weight slice for layer l
      shift:(1, Lpad)
      feat: (1, TN, Lpad)     per-point output tile
      glob: (1, Lpad)         global max (resident across point tiles)
    """
    n = (len(refs) - 3) // 2
    x_refs = refs[:n]
    w_refs = refs[n:2 * n]
    shift_ref = refs[2 * n]
    feat_ref = refs[2 * n + 1]
    glob_ref = refs[2 * n + 2]

    t = pl.program_id(1)

    y = jnp.dot(x_refs[0][0], w_refs[0][...],
                preferred_element_type=jnp.float32)
    for i in range(1, n):                         # fused concat: sum of partials
        y = y + jnp.dot(x_refs[i][0], w_refs[i][...],
                        preferred_element_type=jnp.float32)
    y = y + shift_ref[...]
    y = jnp.where(y > 0, y, LEAKY_SLOPE * y)
    feat_ref[0] = y

    @pl.when(t == 0)
    def _():
        glob_ref[...] = jnp.full_like(glob_ref, -jnp.inf)
    glob_ref[...] = jnp.maximum(glob_ref[...],
                                jnp.max(y, axis=0, keepdims=True))


# -----------------------------------------------------------------------------
# Wrappers (pallas_call)
# -----------------------------------------------------------------------------
def edge_conv(x, idx, wdif, wbase, shift, n_tile):
    B, N, Cin = x.shape
    K = idx.shape[-1]
    Cout = wdif.shape[-1]
    return pl.pallas_call(
        _edge_conv_kernel,
        out_shape=jax.ShapeDtypeStruct((B, N, Cout), jnp.float32),
        grid=(B, N // n_tile),
        in_specs=[
            pl.BlockSpec((1, N, Cin), lambda b, t: (b, 0, 0)),      # full x resident
            pl.BlockSpec((1, n_tile, K), lambda b, t: (b, t, 0)),
            pl.BlockSpec((Cin, Cout), lambda b, t: (0, 0)),
            pl.BlockSpec((Cin, Cout), lambda b, t: (0, 0)),
            pl.BlockSpec((1, Cout), lambda b, t: (0, 0)),
        ],
        out_specs=pl.BlockSpec((1, n_tile, Cout), lambda b, t: (b, t, 0)),
        scratch_shapes=[
            pltpu.VMEM((N, Cout), jnp.bfloat16),   # P  = x @ wdif (gather source)
            pltpu.VMEM((N, Cout), jnp.float32),    # base = x @ wbase + shift
        ],
        compiler_params=pltpu.CompilerParams(
            dimension_semantics=("parallel", "arbitrary"),
            vmem_limit_bytes=_VMEM_LIMIT),
    )(x, idx, wdif, wbase, shift)


def final_conv(xs, ws, shift, n_tile):
    B, N = xs[0].shape[:2]
    L = ws[0].shape[-1]
    in_specs = (
        [pl.BlockSpec((1, n_tile, int(x.shape[-1])), lambda b, t: (b, t, 0))
         for x in xs]
        + [pl.BlockSpec((int(w.shape[0]), L), lambda b, t: (0, 0)) for w in ws]
        + [pl.BlockSpec((1, L), lambda b, t: (0, 0))]
    )
    feats, glob = pl.pallas_call(
        _final_conv_kernel,
        out_shape=(jax.ShapeDtypeStruct((B, N, L), jnp.float32),
                   jax.ShapeDtypeStruct((B, L), jnp.float32)),
        grid=(B, N // n_tile),
        in_specs=in_specs,
        out_specs=(pl.BlockSpec((1, n_tile, L), lambda b, t: (b, t, 0)),
                   pl.BlockSpec((1, L), lambda b, t: (b, 0))),
        compiler_params=pltpu.CompilerParams(
            dimension_semantics=("parallel", "arbitrary"),
            vmem_limit_bytes=_VMEM_LIMIT),
    )(*xs, *ws, shift)
    return feats, glob


# -----------------------------------------------------------------------------
# Plain-JAX glue
# -----------------------------------------------------------------------------
def knn_idx(pts, k):
    """k nearest neighbors (self included); mirrors knn() / torch_cluster.knn."""
    # TODO(synk): tie-breaking for equidistant points may differ from torch_cluster.
    sq = jnp.sum(pts * pts, axis=-1)                        # (B, N)
    inner = jnp.einsum('bnc,bmc->bnm', pts, pts)            # (B, N, N)
    neg_dist = -(sq[:, :, None] - 2.0 * inner + sq[:, None, :])
    _, idx = jax.lax.top_k(neg_dist, k)                     # (B, N, k)
    return idx.astype(jnp.int32)


def init_params(key, latent_dim, depth=4, bb_size=24, extra_features=0):
    """Deterministic synthetic parameters (conv weights + eval-mode BN stats)."""
    input_features = (3 + extra_features) * 2
    layer_dims = []
    for i in range(depth):
        cin = input_features if i == 0 else bb_size * 2 ** (i + 1) * 2
        cout = bb_size * 4 if i == 0 else cin
        layer_dims.append((cin, cout))
    last_in = bb_size * 2 * sum(2 ** i for i in range(1, depth + 1))

    def bn_affine(kk, cout):
        k1, k2, k3, k4 = jax.random.split(kk, 4)
        gamma = 1.0 + 0.1 * jax.random.normal(k1, (cout,), jnp.float32)
        beta = 0.1 * jax.random.normal(k2, (cout,), jnp.float32)
        mean = 0.1 * jax.random.normal(k3, (cout,), jnp.float32)
        var = 1.0 + 0.5 * jax.random.uniform(k4, (cout,), jnp.float32)
        scale = gamma / jnp.sqrt(var + 1e-5)
        shift = beta - mean * scale
        return scale.reshape(1, cout), shift.reshape(1, cout)

    raw = {"edge_layers": [], "final": None}
    for (cin, cout) in layer_dims:
        key, kw, kb = jax.random.split(key, 3)
        # full conv weight (2*c_point, cout): first half acts on (x_j - x_i),
        # second half on x_i (matches torch.cat((feature - x, x), dim=3)).
        w = jax.random.normal(kw, (cin, cout), jnp.float32) / jnp.sqrt(float(cin))
        scale, shift = bn_affine(kb, cout)
        raw["edge_layers"].append({"w": w, "scale": scale, "shift": shift})

    key, kw, kb = jax.random.split(key, 3)
    w_last = (jax.random.normal(kw, (last_in, latent_dim), jnp.float32)
              / jnp.sqrt(float(last_in)))
    scale, shift = bn_affine(kb, latent_dim)
    raw["final"] = {"w": w_last, "scale": scale, "shift": shift}
    return raw


def prepare_params(raw, latent_dim):
    """Fold eval-mode BatchNorm into the weights and pad channels to x128.

    TODO(synk): BatchNorm is folded as eval-mode affine; training-mode batch
    statistics are not reproduced.
    Padded output columns are exactly zero through the whole network (zero
    weight columns + zero shift + leaky_relu(0) == 0), so they are inert and
    sliced off at the very end.
    """
    edge = []
    prev_pad = None
    for layer in raw["edge_layers"]:
        w, scale, shift = layer["w"], layer["scale"], layer["shift"]
        two_cin, cout = w.shape
        cin = two_cin // 2
        cin_eff = cin if prev_pad is None else prev_pad   # padded input width
        cout_pad = _pad128(cout)
        w_dif = w[:cin] * scale                           # fold BN scale
        w_base = (w[cin:] - w[:cin]) * scale              # (W_cen - W_dif)*scale
        wdif_p = jnp.zeros((cin_eff, cout_pad), jnp.float32).at[:cin, :cout].set(w_dif)
        wbase_p = jnp.zeros((cin_eff, cout_pad), jnp.float32).at[:cin, :cout].set(w_base)
        shift_p = jnp.zeros((1, cout_pad), jnp.float32).at[:, :cout].set(shift)
        edge.append({"wdif": wdif_p, "wbase": wbase_p, "shift": shift_p,
                     "cout": cout})
        prev_pad = cout_pad

    w, scale, shift = raw["final"]["w"], raw["final"]["scale"], raw["final"]["shift"]
    lat_pad = _pad128(latent_dim)
    ws = []
    row = 0
    for layer in edge:
        cout = layer["cout"]
        cpad = layer["wdif"].shape[1]
        w_l = w[row:row + cout] * scale                   # fold BN scale
        w_lp = jnp.zeros((cpad, lat_pad), jnp.float32).at[:cout, :latent_dim].set(w_l)
        ws.append(w_lp)
        row += cout
    shift_p = jnp.zeros((1, lat_pad), jnp.float32).at[:, :latent_dim].set(shift)
    return {"edge": edge,
            "final": {"ws": ws, "shift": shift_p, "latent": latent_dim}}


def dgcnn_encoder_forward(params, x, k):
    """x: (B, N, 3 + extra).  Returns (global_feature, features_per_point)."""
    B, N, _ = x.shape
    n_tile = _pick_tile(N)
    idx = knn_idx(x[..., :3], k)                 # same neighbors for all layers
    cur = x.astype(jnp.float32)
    outs = []
    for layer in params["edge"]:
        cur = edge_conv(cur, idx, layer["wdif"], layer["wbase"],
                        layer["shift"], n_tile)
        outs.append(cur)
    # Concat of the 4 layer outputs is fused into the final conv kernel.
    feats, glob = final_conv(outs, params["final"]["ws"],
                             params["final"]["shift"], n_tile)
    latent = params["final"]["latent"]
    return glob[:, :latent], feats[:, :, :latent]


# -----------------------------------------------------------------------------
if __name__ == "__main__":
    key = jax.random.PRNGKey(0)
    B, N, latent_dim, k = 2, 16, 32, 8          # small shapes; k <= N
    kx, kp = jax.random.split(key)
    x = jax.random.normal(kx, (B, N, 3), dtype=jnp.float32)
    raw = init_params(kp, latent_dim)
    params = prepare_params(raw, latent_dim)

    global_feature, features_per_point = dgcnn_encoder_forward(params, x, k)
    jax.block_until_ready((global_feature, features_per_point))

    assert global_feature.shape == (B, latent_dim)
    assert features_per_point.shape == (B, N, latent_dim)
    assert bool(jnp.all(jnp.isfinite(global_feature)))
    assert bool(jnp.all(jnp.isfinite(features_per_point)))
    print("KERNEL_OK")
</pallas_src>

<mosaic_0001>
module attributes {stable_mosaic.version = 11 : i64} {
  func.func @_edge_conv_kernel(%arg0: i32, %arg1: i32, %arg2: memref<1x16x3xf32, #tpu.memory_space<vmem>>, %arg3: memref<1x16x8xi32, #tpu.memory_space<vmem>>, %arg4: memref<3x128xf32, #tpu.memory_space<vmem>>, %arg5: memref<3x128xf32, #tpu.memory_space<vmem>>, %arg6: memref<1x128xf32, #tpu.memory_space<vmem>>, %arg7: memref<1x16x128xf32, #tpu.memory_space<vmem>>, %arg8: memref<16x128xbf16, #tpu.memory_space<vmem>>, %arg9: memref<16x128xf32, #tpu.memory_space<vmem>>) attributes {dimension_semantics = [#tpu.dimension_semantics<parallel>, #tpu.dimension_semantics<arbitrary>], iteration_bounds = array<i64: 2, 1>, scalar_prefetch = 0 : i64, scratch_operands = 2 : i64, tpu.core_type = #tpu.core_type<tc>, window_params = [{transform_indices = @transform_0, window_bounds = array<i64: 1, 16, 3>}, {transform_indices = @transform_1, window_bounds = array<i64: 1, 16, 8>}, {pipeline_mode = #tpu.pipeline_mode<synchronous>, transform_indices = @transform_2, window_bounds = array<i64: 3, 128>}, {pipeline_mode = #tpu.pipeline_mode<synchronous>, transform_indices = @transform_3, window_bounds = array<i64: 3, 128>}, {pipeline_mode = #tpu.pipeline_mode<synchronous>, transform_indices = @transform_4, window_bounds = array<i64: 1, 128>}, {transform_indices = @transform_5, window_bounds = array<i64: 1, 16, 128>}]} {
    %c0_i32 = arith.constant 0 : i32
    %0 = arith.cmpi eq, %arg1, %c0_i32 : i32
    %1 = arith.extui %0 : i1 to i32
    %c0_i32_0 = arith.constant 0 : i32
    %2 = arith.cmpi ne, %1, %c0_i32_0 : i32
    scf.if %2 {
      %c0_11 = arith.constant 0 : index
      %c0_12 = arith.constant 0 : index
      %c0_13 = arith.constant 0 : index
      %85 = vector.load %arg2[%c0_11, %c0_12, %c0_13] : memref<1x16x3xf32, #tpu.memory_space<vmem>>, vector<1x16x3xf32>
      %86 = vector.shape_cast %85 : vector<1x16x3xf32> to vector<16x3xf32>
      %c0_14 = arith.constant 0 : index
      %c0_15 = arith.constant 0 : index
      %87 = vector.load %arg4[%c0_14, %c0_15] : memref<3x128xf32, #tpu.memory_space<vmem>>, vector<3x128xf32>
      %cst_16 = arith.constant dense<0.000000e+00> : vector<16x128xf32>
      %88 = tpu.matmul %86, %87, %cst_16 {dimension_numbers = #tpu.dot_dimension_numbers<[1], [0], [0], [1], [0, 0, 1, 1], [], []>} : vector<16x3xf32>, vector<3x128xf32>, vector<16x128xf32> -> vector<16x128xf32>
      %89 = arith.truncf %88 : vector<16x128xf32> to vector<16x128xbf16>
      %c0_17 = arith.constant 0 : index
      %c0_18 = arith.constant 0 : index
      %90 = vector.load %arg8[%c0_17, %c0_18] : memref<16x128xbf16, #tpu.memory_space<vmem>>, vector<16x128xbf16>
      tpu.vector_store %arg8[%c0_17, %c0_18], %89 {strides = array<i32>} : memref<16x128xbf16, #tpu.memory_space<vmem>>, vector<16x128xbf16>,
      %c0_19 = arith.constant 0 : index
      %c0_20 = arith.constant 0 : index
      %91 = vector.load %arg5[%c0_19, %c0_20] : memref<3x128xf32, #tpu.memory_space<vmem>>, vector<3x128xf32>
      %cst_21 = arith.constant dense<0.000000e+00> : vector<16x128xf32>
      %92 = tpu.matmul %86, %91, %cst_21 {dimension_numbers = #tpu.dot_dimension_numbers<[1], [0], [0], [1], [0, 0, 1, 1], [], []>} : vector<16x3xf32>, vector<3x128xf32>, vector<16x128xf32> -> vector<16x128xf32>
      %c0_22 = arith.constant 0 : index
      %c0_23 = arith.constant 0 : index
      %93 = vector.load %arg6[%c0_22, %c0_23] : memref<1x128xf32, #tpu.memory_space<vmem>>, vector<1x128xf32>
      %94 = vector.broadcast %93 : vector<1x128xf32> to vector<16x128xf32>
      %95 = arith.addf %92, %94 : vector<16x128xf32>
      %c0_24 = arith.constant 0 : index
      %c0_25 = arith.constant 0 : index
      %96 = vector.load %arg9[%c0_24, %c0_25] : memref<16x128xf32, #tpu.memory_space<vmem>>, vector<16x128xf32>
      tpu.vector_store %arg9[%c0_24, %c0_25], %95 {strides = array<i32>} : memref<16x128xf32, #tpu.memory_space<vmem>>, vector<16x128xf32>,
    } else {
    }
    %c0 = arith.constant 0 : index
    %c0_1 = arith.constant 0 : index
    %c0_2 = arith.constant 0 : index
    %3 = vector.load %arg3[%c0, %c0_1, %c0_2] : memref<1x16x8xi32, #tpu.memory_space<vmem>>, vector<1x16x8xi32>
    %4 = vector.shape_cast %3 : vector<1x16x8xi32> to vector<16x8xi32>
    %5 = tpu.iota {dimensions = array<i32: 1>} : vector<16x16xi32>
    %c0_3 = arith.constant 0 : index
    %c0_4 = arith.constant 0 : index
    %6 = vector.load %arg8[%c0_3, %c0_4] : memref<16x128xbf16, #tpu.memory_space<vmem>>, vector<16x128xbf16>
    %7 = vector.extract_strided_slice %4 {offsets = [0, 0], sizes = [16, 1], strides = [1, 1]} : vector<16x8xi32> to vector<16x1xi32>
    %8 = vector.broadcast %7 : vector<16x1xi32> to vector<16x16xi32>
    %9 = arith.cmpi eq, %8, %5 : vector<16x16xi32>
    %10 = arith.extui %9 : vector<16x16xi1> to vector<16x16xi32>
    %11 = arith.sitofp %10 : vector<16x16xi32> to vector<16x16xf32>
    %12 = arith.truncf %11 : vector<16x16xf32> to vector<16x16xbf16>
    %13 = vector.extract_strided_slice %4 {offsets = [0, 1], sizes = [16, 1], strides = [1, 1]} : vector<16x8xi32> to vector<16x1xi32>
    %14 = vector.broadcast %13 : vector<16x1xi32> to vector<16x16xi32>
    %15 = arith.cmpi eq, %14, %5 : vector<16x16xi32>
    %16 = arith.extui %15 : vector<16x16xi1> to vector<16x16xi32>
    %17 = arith.sitofp %16 : vector<16x16xi32> to vector<16x16xf32>
    %18 = arith.truncf %17 : vector<16x16xf32> to vector<16x16xbf16>
    %19 = vector.extract_strided_slice %4 {offsets = [0, 2], sizes = [16, 1], strides = [1, 1]} : vector<16x8xi32> to vector<16x1xi32>
    %20 = vector.broadcast %19 : vector<16x1xi32> to vector<16x16xi32>
    %21 = arith.cmpi eq, %20, %5 : vector<16x16xi32>
    %22 = arith.extui %21 : vector<16x16xi1> to vector<16x16xi32>
    %23 = arith.sitofp %22 : vector<16x16xi32> to vector<16x16xf32>
    %24 = arith.truncf %23 : vector<16x16xf32> to vector<16x16xbf16>
    %25 = vector.extract_strided_slice %4 {offsets = [0, 3], sizes = [16, 1], strides = [1, 1]} : vector<16x8xi32> to vector<16x1xi32>
    %26 = vector.broadcast %25 : vector<16x1xi32> to vector<16x16xi32>
    %27 = arith.cmpi eq, %26, %5 : vector<16x16xi32>
    %28 = arith.extui %27 : vector<16x16xi1> to vector<16x16xi32>
    %29 = arith.sitofp %28 : vector<16x16xi32> to vector<16x16xf32>
    %30 = arith.truncf %29 : vector<16x16xf32> to vector<16x16xbf16>
    %31 = vector.extract_strided_slice %4 {offsets = [0, 4], sizes = [16, 1], strides = [1, 1]} : vector<16x8xi32> to vector<16x1xi32>
    %32 = vector.broadcast %31 : vector<16x1xi32> to vector<16x16xi32>
    %33 = arith.cmpi eq, %32, %5 : vector<16x16xi32>
    %34 = arith.extui %33 : vector<16x16xi1> to vector<16x16xi32>
    %35 = arith.sitofp %34 : vector<16x16xi32> to vector<16x16xf32>
    %36 = arith.truncf %35 : vector<16x16xf32> to vector<16x16xbf16>
    %37 = vector.extract_strided_slice %4 {offsets = [0, 5], sizes = [16, 1], strides = [1, 1]} : vector<16x8xi32> to vector<16x1xi32>
    %38 = vector.broadcast %37 : vector<16x1xi32> to vector<16x16xi32>
    %39 = arith.cmpi eq, %38, %5 : vector<16x16xi32>
    %40 = arith.extui %39 : vector<16x16xi1> to vector<16x16xi32>
    %41 = arith.sitofp %40 : vector<16x16xi32> to vector<16x16xf32>
    %42 = arith.truncf %41 : vector<16x16xf32> to vector<16x16xbf16>
    %43 = vector.extract_strided_slice %4 {offsets = [0, 6], sizes = [16, 1], strides = [1, 1]} : vector<16x8xi32> to vector<16x1xi32>
    %44 = vector.broadcast %43 : vector<16x1xi32> to vector<16x16xi32>
    %45 = arith.cmpi eq, %44, %5 : vector<16x16xi32>
    %46 = arith.extui %45 : vector<16x16xi1> to vector<16x16xi32>
    %47 = arith.sitofp %46 : vector<16x16xi32> to vector<16x16xf32>
    %48 = arith.truncf %47 : vector<16x16xf32> to vector<16x16xbf16>
    %49 = vector.extract_strided_slice %4 {offsets = [0, 7], sizes = [16, 1], strides = [1, 1]} : vector<16x8xi32> to vector<16x1xi32>
    %50 = vector.broadcast %49 : vector<16x1xi32> to vector<16x16xi32>
    %51 = arith.cmpi eq, %50, %5 : vector<16x16xi32>
    %52 = arith.extui %51 : vector<16x16xi1> to vector<16x16xi32>
    %53 = arith.sitofp %52 : vector<16x16xi32> to vector<16x16xf32>
    %54 = arith.truncf %53 : vector<16x16xf32> to vector<16x16xbf16>
    %55 = tpu.concatenate %12, %18, %24, %30, %36, %42, %48, %54 in 0 : vector<16x16xbf16>, vector<16x16xbf16>, vector<16x16xbf16>, vector<16x16xbf16>, vector<16x16xbf16>, vector<16x16xbf16>, vector<16x16xbf16>, vector<16x16xbf16> -> vector<128x16xbf16>
    %cst = arith.constant dense<0.000000e+00> : vector<128x128xf32>
    %56 = tpu.matmul %55, %6, %cst {dimension_numbers = #tpu.dot_dimension_numbers<[1], [0], [0], [1], [0, 0, 1, 1], [], []>} : vector<128x16xbf16>, vector<16x128xbf16>, vector<128x128xf32> -> vector<128x128xf32>
    %57 = vector.extract_strided_slice %56 {offsets = [0, 0], sizes = [16, 128], strides = [1, 1]} : vector<128x128xf32> to vector<16x128xf32>
    %58 = vector.extract_strided_slice %56 {offsets = [16, 0], sizes = [16, 128], strides = [1, 1]} : vector<128x128xf32> to vector<16x128xf32>
    %59 = arith.maximumf %57, %58 : vector<16x128xf32>
    %60 = vector.extract_strided_slice %56 {offsets = [32, 0], sizes = [16, 128], strides = [1, 1]} : vector<128x128xf32> to vector<16x128xf32>
    %61 = arith.maximumf %59, %60 : vector<16x128xf32>
    %62 = vector.extract_strided_slice %56 {offsets = [48, 0], sizes = [16, 128], strides = [1, 1]} : vector<128x128xf32> to vector<16x128xf32>
    %63 = arith.maximumf %61, %62 : vector<16x128xf32>
    %64 = vector.extract_strided_slice %56 {offsets = [64, 0], sizes = [16, 128], strides = [1, 1]} : vector<128x128xf32> to vector<16x128xf32>
    %65 = arith.maximumf %63, %64 : vector<16x128xf32>
    %66 = vector.extract_strided_slice %56 {offsets = [80, 0], sizes = [16, 128], strides = [1, 1]} : vector<128x128xf32> to vector<16x128xf32>
    %67 = arith.maximumf %65, %66 : vector<16x128xf32>
    %68 = vector.extract_strided_slice %56 {offsets = [96, 0], sizes = [16, 128], strides = [1, 1]} : vector<128x128xf32> to vector<16x128xf32>
    %69 = arith.maximumf %67, %68 : vector<16x128xf32>
    %70 = vector.extract_strided_slice %56 {offsets = [112, 0], sizes = [16, 128], strides = [1, 1]} : vector<128x128xf32> to vector<16x128xf32>
    %71 = arith.maximumf %69, %70 : vector<16x128xf32>
    %c16_i32 = arith.constant 16 : i32
    %72 = arith.muli %arg1, %c16_i32 : i32
    %73 = tpu.assume_multiple %72, 16 : i32
    %74 = arith.index_cast %73 : i32 to index
    %c0_5 = arith.constant 0 : index
    %75 = vector.load %arg9[%74, %c0_5] : memref<16x128xf32, #tpu.memory_space<vmem>>, vector<16x128xf32>
    %76 = arith.addf %71, %75 : vector<16x128xf32>
    %cst_6 = arith.constant 0.000000e+00 : f32
    %77 = vector.broadcast %cst_6 : f32 to vector<16x128xf32>
    %78 = arith.cmpf ogt, %76, %77 : vector<16x128xf32>
    %cst_7 = arith.constant 2.000000e-01 : f32
    %79 = vector.broadcast %cst_7 : f32 to vector<16x128xf32>
    %80 = arith.mulf %79, %76 : vector<16x128xf32>
    %81 = arith.select %78, %76, %80 : vector<16x128xi1>, vector<16x128xf32>
    %c0_8 = arith.constant 0 : index
    %c0_9 = arith.constant 0 : index
    %c0_10 = arith.constant 0 : index
    %82 = vector.load %arg7[%c0_8, %c0_9, %c0_10] : memref<1x16x128xf32, #tpu.memory_space<vmem>>, vector<1x16x128xf32>
    %83 = vector.shape_cast %82 : vector<1x16x128xf32> to vector<16x128xf32>
    %84 = vector.shape_cast %81 : vector<16x128xf32> to vector<1x16x128xf32>
    tpu.vector_store %arg7[%c0_8, %c0_9, %c0_10], %84 {strides = array<i32>} : memref<1x16x128xf32, #tpu.memory_space<vmem>>, vector<1x16x128xf32>,
    return
  }
  func.func @transform_0(%arg0: i32, %arg1: i32) -> (i32, i32, i32) {
    %c0_i32 = arith.constant 0 : i32
    %c0_i32_0 = arith.constant 0 : i32
    %c0_i32_1 = arith.constant 0 : i32
    return %arg0, %c0_i32, %c0_i32_0 : i32, i32, i32
  }
  func.func @transform_1(%arg0: i32, %arg1: i32) -> (i32, i32, i32) {
    %c0_i32 = arith.constant 0 : i32
    %c0_i32_0 = arith.constant 0 : i32
    return %arg0, %arg1, %c0_i32 : i32, i32, i32
  }
  func.func @transform_2(%arg0: i32, %arg1: i32) -> (i32, i32) {
    %c0_i32 = arith.constant 0 : i32
    %c0_i32_0 = arith.constant 0 : i32
    %c0_i32_1 = arith.constant 0 : i32
    return %c0_i32, %c0_i32_0 : i32, i32
  }
  func.func @transform_3(%arg0: i32, %arg1: i32) -> (i32, i32) {
    %c0_i32 = arith.constant 0 : i32
    %c0_i32_0 = arith.constant 0 : i32
    %c0_i32_1 = arith.constant 0 : i32
    return %c0_i32, %c0_i32_0 : i32, i32
  }
  func.func @transform_4(%arg0: i32, %arg1: i32) -> (i32, i32) {
    %c0_i32 = arith.constant 0 : i32
    %c0_i32_0 = arith.constant 0 : i32
    %c0_i32_1 = arith.constant 0 : i32
    return %c0_i32, %c0_i32_0 : i32, i32
  }
  func.func @transform_5(%arg0: i32, %arg1: i32) -> (i32, i32, i32) {
    %c0_i32 = arith.constant 0 : i32
    %c0_i32_0 = arith.constant 0 : i32
    return %arg0, %arg1, %c0_i32 : i32, i32, i32
  }
}

</mosaic_0001>

<llo_original>
// kernel: tpu_custom_call.1
$region0: #{tpu_custom_call.1}
  #allocation0 [shape = 'u32[]', space=smem, size = 0x4, offset = 0x4, fixed_abs, tag = 'smem constant byte address 0x4 - core index']
  #allocation1 [shape = 'u32[72,128]{1,0:T(1,128)}', space=vmem, size = 0x9000, scoped, tag = 'internal scratch']
  #allocation2 [shape = 'bf16[16,128]{1,0:T(8,128)(2,1)}', space=vmem, size = 0x1000, scoped, tag = 'scratch operand']
  #allocation3 [shape = 'f32[16,128]{1,0:T(8,128)}', space=vmem, size = 0x2000, scoped, tag = 'scratch operand']
  %s0 = inlined_call_operand.vmem [shape: f32[2,16,3], index: 0, kind: input, shape index: {}]
  %s1 = inlined_call_operand.vmem [shape: s32[2,16,8], index: 1, kind: input, shape index: {}]
  %s2 = inlined_call_operand.vmem [shape: f32[3,128], index: 2, kind: input, shape index: {}]
  %s3 = inlined_call_operand.vmem [shape: f32[3,128], index: 3, kind: input, shape index: {}]
  %s4 = inlined_call_operand.vmem [shape: f32[1,128], index: 4, kind: input, shape index: {}]
  %s5 = inlined_call_operand.hbm [shape: f32[2,16,128], index: 5, kind: output, shape index: {}]
  %s6 = sld [smem:[#allocation0]]
  $region57: #{tpu_custom_call.1} parent=0
    _
  %s8 = ssub.s32 1, %s6
  %s9 = scalar_select 0, %s8, %s6
  $region1: #{tpu_custom_call.1} parent=0
    #allocation4 [shape = 'u8[16384]{0}', space=vmem, size = 0x4000, scoped, tag = 'output window, operand 0']
    #allocation5 [shape = 's32[2]{0}', space=sflag, size = 0x8, scoped, tag = 'scoped memory for tpu_custom_call.1']
    %10 = vsyncpa [#allocation5], 0
    %s11 = scalar_lea.sflag [#allocation5], 1
    %12 = vsyncpa %s11, 0
    loop: start=0, step=1, limit=4
    $region2: #{tpu_custom_call.1} parent=1 // loop_pre_header
      _
    $region3: #{tpu_custom_call.1} parent=1 // loop_header
      %s14 = sphi 0, %s18
      %p15 = scmp.ge.s32.totalorder %s14, 4
      %s21 = sphi 0, %s33
      %s22 = sphi 0, %s29
      %s23 = sphi 0, %s21
      %s24 = sphi 0, %s22
      %s25 = sphi 0, %s23
      %s26 = sphi 0, %s24
      %s36 = sphi 0, %s38
      %s39 = sphi 0, %s36
      %s40 = sphi 0, %s39
      %s56 = sphi 0, %s40
      %s64 = sphi 0, %s66
      %s67 = sphi 0, %s64
      %s68 = sphi 0, %s67
      %s84 = sphi 0, %s68
      %s88 = sphi 0, %s88
      %s90 = sphi 0, %s88
      %s91 = sphi 0, %s90
      %s105 = sphi 0, %s91
      %s109 = sphi 0, %s109
      %s111 = sphi 0, %s109
      %s112 = sphi 0, %s111
      %s126 = sphi 0, %s112
      %s130 = sphi 0, %s130
      %s132 = sphi 0, %s130
      %s133 = sphi 0, %s132
      %s147 = sphi 0, %s133
      %s155 = sphi 0, %s157
      %s158 = sphi 0, %s155
      %s159 = sphi 0, %s158
      %s175 = sphi 0, %s159
    $region4: #{tpu_custom_call.1} parent=1 // loop_header_branch
      %17 = sbr.rel (%p15) target = $region8
    $region5: #{tpu_custom_call.1} parent=1 // loop_body
      %s19 = ssub.s32 %s14, 1
      %s20 = ssub.s32 %s14, 2
      %s27 = sadd.s32 1, %s22
      %p28 = scmp.ge.s32.totalorder %s27, 1
      %s29 = scalar_select %p28, 0, %s27
      %s30 = sadd.s32 1, %s21
      %s31 = scalar_select %p28, %s30, %s21
      %p32 = scmp.ge.s32.totalorder %s31, 2
      %s33 = scalar_select %p32, 0, %s31
      %s34 = ssub.s32 %s21, %s33
      %p35 = scmp.eq.s32.totalorder %s34, 0
      %s37 = sadd.s32 %s36, 1
      %s38 = scalar_select %p35, %s36, %s37
      %p41 = pneg %p35
      %p42 = scmp.eq.s32.totalorder %s14, 1
      %p43 = por %p41, %p42
      %p44 = scmp.ne.s32.totalorder %s36, %s39
      %p45 = scmp.eq.s32.totalorder %s14, 0
      %p46 = por %p44, %p45
      %p47 = scmp.ne.s32.totalorder %s36, %s39
      %p48 = scmp.eq.s32.totalorder %s19, 1
      %p49 = por %p47, %p48
      %p50 = scmp.ne.s32.totalorder %s39, %s40
      %p51 = scmp.eq.s32.totalorder %s19, 0
      %p52 = por %p50, %p51
      %p53 = scmp.ne.s32.totalorder %s39, %s40
      %p54 = scmp.eq.s32.totalorder %s20, 1
      %p55 = por %p53, %p54
      %p57 = scmp.ne.s32.totalorder %s40, %s56
      %p58 = scmp.eq.s32.totalorder %s20, 0
      %p59 = por %p57, %p58
      %s60 = ssub.s32 %s21, %s33
      %s61 = ssub.s32 %s22, %s29
      %s62 = sor.u32 %s60, %s61
      %p63 = scmp.eq.s32.totalorder %s62, 0
      %s65 = sadd.s32 %s64, 1
      %s66 = scalar_select %p63, %s64, %s65
      %p69 = pneg %p63
      %p70 = scmp.eq.s32.totalorder %s14, 1
      %p71 = por %p69, %p70
      %p72 = scmp.ne.s32.totalorder %s64, %s67
      %p73 = scmp.eq.s32.totalorder %s14, 0
      %p74 = por %p72, %p73
      %p75 = scmp.ne.s32.totalorder %s64, %s67
      %p76 = scmp.eq.s32.totalorder %s19, 1
      %p77 = por %p75, %p76
      %p78 = scmp.ne.s32.totalorder %s67, %s68
      %p79 = scmp.eq.s32.totalorder %s19, 0
      %p80 = por %p78, %p79
      %p81 = scmp.ne.s32.totalorder %s67, %s68
      %p82 = scmp.eq.s32.totalorder %s20, 1
      %p83 = por %p81, %p82
      %p85 = scmp.ne.s32.totalorder %s68, %s84
      %p86 = scmp.eq.s32.totalorder %s20, 0
      %p87 = por %p85, %p86
      %s89 = sadd.s32 %s88, 1
      %p92 = scmp.eq.s32.totalorder %s14, 1
      %p93 = scmp.ne.s32.totalorder %s88, %s90
      %p94 = scmp.eq.s32.totalorder %s14, 0
      %p95 = por %p93, %p94
      %p96 = scmp.ne.s32.totalorder %s88, %s90
      %p97 = scmp.eq.s32.totalorder %s19, 1
      %p98 = por %p96, %p97
      %p99 = scmp.ne.s32.totalorder %s90, %s91
      %p100 = scmp.eq.s32.totalorder %s19, 0
      %p101 = por %p99, %p100
      %p102 = scmp.ne.s32.totalorder %s90, %s91
      %p103 = scmp.eq.s32.totalorder %s20, 1
      %p104 = por %p102, %p103
      %p106 = scmp.ne.s32.totalorder %s91, %s105
      %p107 = scmp.eq.s32.totalorder %s20, 0
      %p108 = por %p106, %p107
      %s110 = sadd.s32 %s109, 1
      %p113 = scmp.eq.s32.totalorder %s14, 1
      %p114 = scmp.ne.s32.totalorder %s109, %s111
      %p115 = scmp.eq.s32.totalorder %s14, 0
      %p116 = por %p114, %p115
      %p117 = scmp.ne.s32.totalorder %s109, %s111
      %p118 = scmp.eq.s32.totalorder %s19, 1
      %p119 = por %p117, %p118
      %p120 = scmp.ne.s32.totalorder %s111, %s112
      %p121 = scmp.eq.s32.totalorder %s19, 0
      %p122 = por %p120, %p121
      %p123 = scmp.ne.s32.totalorder %s111, %s112
      %p124 = scmp.eq.s32.totalorder %s20, 1
      %p125 = por %p123, %p124
      %p127 = scmp.ne.s32.totalorder %s112, %s126
      %p128 = scmp.eq.s32.totalorder %s20, 0
      %p129 = por %p127, %p128
      %s131 = sadd.s32 %s130, 1
      %p134 = scmp.eq.s32.totalorder %s14, 1
      %p135 = scmp.ne.s32.totalorder %s130, %s132
      %p136 = scmp.eq.s32.totalorder %s14, 0
      %p137 = por %p135, %p136
      %p138 = scmp.ne.s32.totalorder %s130, %s132
      %p139 = scmp.eq.s32.totalorder %s19, 1
      %p140 = por %p138, %p139
      %p141 = scmp.ne.s32.totalorder %s132, %s133
      %p142 = scmp.eq.s32.totalorder %s19, 0
      %p143 = por %p141, %p142
      %p144 = scmp.ne.s32.totalorder %s132, %s133
      %p145 = scmp.eq.s32.totalorder %s20, 1
      %p146 = por %p144, %p145
      %p148 = scmp.ne.s32.totalorder %s133, %s147
      %p149 = scmp.eq.s32.totalorder %s20, 0
      %p150 = por %p148, %p149
      %s151 = ssub.s32 %s21, %s33
      %s152 = ssub.s32 %s22, %s29
      %s153 = sor.u32 %s151, %s152
      %p154 = scmp.eq.s32.totalorder %s153, 0
      %s156 = sadd.s32 %s155, 1
      %s157 = scalar_select %p154, %s155, %s156
      %p160 = pneg %p154
      %p161 = scmp.eq.s32.totalorder %s14, 1
      %p162 = por %p160, %p161
      %p163 = scmp.ne.s32.totalorder %s155, %s158
      %p164 = scmp.eq.s32.totalorder %s14, 0
      %p165 = por %p163, %p164
      %p166 = scmp.ne.s32.totalorder %s155, %s158
      %p167 = scmp.eq.s32.totalorder %s19, 1
      %p168 = por %p166, %p167
      %p169 = scmp.ne.s32.totalorder %s158, %s159
      %p170 = scmp.eq.s32.totalorder %s19, 0
      %p171 = por %p169, %p170
      %p172 = scmp.ne.s32.totalorder %s158, %s159
      %p173 = scmp.eq.s32.totalorder %s20, 1
      %p174 = por %p172, %p173
      %p176 = scmp.ne.s32.totalorder %s159, %s175
      %p177 = scmp.eq.s32.totalorder %s20, 0
      %p178 = por %p176, %p177
      %p179 = scmp.le.s32.totalorder 1, %s14
      %p180 = scmp.lt.s32.totalorder %s14, 3
      %p181 = pnand %p179, %p180
      %p182 = pneg %p181
      // Predicated region
      $region9: #{tpu_custom_call.1} parent=5 // pred_check
        _
      $region10: #{tpu_custom_call.1} parent=5 // pred_check_branch
        %184 = sbr.rel (%p181) target = $region12
      $region11: #{tpu_custom_call.1} parent=5 // pred_region
        %s185 = ssub.s32 %s14, 1
        // Predicated region
        $region13: #{tpu_custom_call.1} parent=11 // pred_check
          %p186 = pneg %p101
        $region14: #{tpu_custom_call.1} parent=11 // pred_check_branch
          %188 = sbr.rel (%p186) target = $region16
        $region15: #{tpu_custom_call.1} parent=11 // pred_region
          _
        $region16: #{tpu_custom_call.1} parent=11 // pred_fallthru
          _
        // Predicated region
        $region17: #{tpu_custom_call.1} parent=11 // pred_check
          %p189 = pneg %p122
        $region18: #{tpu_custom_call.1} parent=11 // pred_check_branch
          %191 = sbr.rel (%p189) target = $region20
        $region19: #{tpu_custom_call.1} parent=11 // pred_region
          _
        $region20: #{tpu_custom_call.1} parent=11 // pred_fallthru
          _
        // Predicated region
        $region21: #{tpu_custom_call.1} parent=11 // pred_check
          %p192 = pneg %p143
        $region22: #{tpu_custom_call.1} parent=11 // pred_check_branch
          %194 = sbr.rel (%p192) target = $region24
        $region23: #{tpu_custom_call.1} parent=11 // pred_region
          _
        $region24: #{tpu_custom_call.1} parent=11 // pred_fallthru
          _
      $region12: #{tpu_custom_call.1} parent=5 // pred_fallthru
        _
      %p195 = scmp.lt.s32.totalorder %s14, 2
      // Predicated region
      $region25: #{tpu_custom_call.1} parent=5 // pred_check
        %p196 = pneg %p195
      $region26: #{tpu_custom_call.1} parent=5 // pred_check_branch
        %198 = sbr.rel (%p196) target = $region28
      $region27: #{tpu_custom_call.1} parent=5 // pred_region
        // Predicated region
        $region29: #{tpu_custom_call.1} parent=27 // pred_check
          %p199 = pneg %p46
        $region30: #{tpu_custom_call.1} parent=27 // pred_check_branch
          %201 = sbr.rel (%p199) target = $region32
        $region31: #{tpu_custom_call.1} parent=27 // pred_region
          %p202 = scmp.lt.s32.totalorder %s21, 1
          %s203 = scalar_select %p202, %s21, 1
          %s204 = smul.addr %s203, 2
          %s205 = smul.addr %s204, 8
          %s206 = scalar_lea.vmem %s0, %s205
        $region32: #{tpu_custom_call.1} parent=27 // pred_fallthru
          _
        // Predicated region
        $region33: #{tpu_custom_call.1} parent=27 // pred_check
          %p207 = pneg %p74
        $region34: #{tpu_custom_call.1} parent=27 // pred_check_branch
          %209 = sbr.rel (%p207) target = $region36
        $region35: #{tpu_custom_call.1} parent=27 // pred_region
          %s210 = smul.u32 2, %s22
          %p211 = scmp.lt.s32.totalorder %s21, 1
          %s212 = scalar_select %p211, %s21, 1
          %p213 = scmp.lt.s32.totalorder %s210, 1
          %s214 = scalar_select %p213, %s210, 1
          %s215 = smul.addr %s212, 2
          %s216 = sadd.s32 %s214, %s215
          %s217 = smul.addr %s216, 8
          %s218 = scalar_lea.vmem %s1, %s217
          %s219 = smul.u32 2, %s22
        $region36: #{tpu_custom_call.1} parent=27 // pred_fallthru
          _
      $region28: #{tpu_custom_call.1} parent=5 // pred_fallthru
        _
      %p220 = scmp.le.s32.totalorder 1, %s14
      %p221 = scmp.lt.s32.totalorder %s14, 3
      %p222 = pnand %p220, %p221
      %p223 = pneg %p222
      // Predicated region
      $region37: #{tpu_custom_call.1} parent=5 // pred_check
        _
      $region38: #{tpu_custom_call.1} parent=5 // pred_check_branch
        %225 = sbr.rel (%p222) target = $region40
      $region39: #{tpu_custom_call.1} parent=5 // pred_region
        %s226 = ssub.s32 %s14, 1
        %p227 = scmp.lt.s32.totalorder %s23, 1
        %s228 = scalar_select %p227, %s23, 1
        %s229 = smul.addr %s228, 2
        %s230 = smul.addr %s229, 8
        %s231 = scalar_lea.vmem %s0, %s230
        %p232 = pneg %p52
        %p233 = pneg %p49
        %s234 = smul.u32 2, %s24
        %p235 = scmp.lt.s32.totalorder %s23, 1
        %s236 = scalar_select %p235, %s23, 1
        %p237 = scmp.lt.s32.totalorder %s234, 1
        %s238 = scalar_select %p237, %s234, 1
        %s239 = smul.addr %s236, 2
        %s240 = sadd.s32 %s238, %s239
        %s241 = smul.addr %s240, 8
        %s242 = scalar_lea.vmem %s1, %s241
        %p243 = pneg %p80
        %p244 = pneg %p77
        %p245 = pneg %p101
        %p246 = pneg %p98
        %p247 = pneg %p122
        %p248 = pneg %p119
        %p249 = pneg %p143
        %p250 = pneg %p140
        %p251 = pneg %p171
        %p252 = pneg %p168
        %s253 = sand.u32 %s158, 1
        %s254 = scalar_lea.sflag [#allocation5], %s253
        %s255 = sand.u32 %s158, 1
        %s256 = smul.addr %s255, 16
        %s257 = scalar_lea.vmem [#allocation4], %s256
        %p258 = scmp.lt.s32.totalorder %s23, 1
        %s259 = scalar_select %p258, %s23, 1
        %s260 = smul.addr %s259, 2
        %s261 = smul.addr %s260, 8
        %s262 = scalar_lea.vmem %s0, %s261
        %s263 = smul.u32 2, %s24
        %p264 = scmp.lt.s32.totalorder %s23, 1
        %s265 = scalar_select %p264, %s23, 1
        %p266 = scmp.lt.s32.totalorder %s263, 1
        %s267 = scalar_select %p266, %s263, 1
        %s268 = smul.addr %s265, 2
        %s269 = sadd.s32 %s267, %s268
        %s270 = smul.addr %s269, 8
        %s271 = scalar_lea.vmem %s1, %s270
        %s272 = smul.u32 2, %s24
        %s273 = smul.u32 2, %s24
        %p275 = scmp.eq.s32.totalorder %s24, 0
        // Predicated region
        $region41: #{tpu_custom_call.1} parent=39 // pred_check
          %p276 = pneg %p275
        $region42: #{tpu_custom_call.1} parent=39 // pred_check_branch
          %278 = sbr.rel (%p276) target = $region44
        $region43: #{tpu_custom_call.1} parent=39 // pred_region
          %v279 = vld [vmem:[%s262] sm:$0xff]
          %v280 = vld [vmem:[%s262 + $0x8] sm:$0xff]
          %v281 = vld [vmem:[%s2] sm:$0x7]
          %vm282 = vcmask 23552
          %v284 = vsel %vm282, %v279, 0
          %v287 = vsel %vm282, %v280, 0
          %vm289 = vcmask 1042432
          %v291 = vsel %vm289, %v281, 0
          %293 = vmatpush.msra.mxu0 0.0
          %294 = vmatpush.msra.mxu0 0.0
          %295 = vmatpush.msra.mxu0 0.0
          %296 = vmatpush.msra.mxu0 0.0
          %297 = vmatpush.msra.mxu0 0.0
          %298 = vmatpush.msra.mxu0 0.0
          %299 = vmatpush.msra.mxu0 0.0
          %300 = vmatpush.msra.mxu0 0.0
          %301 = vmatpush.msra.mxu0 0.0
          %302 = vmatpush.msra.mxu0 0.0
          %303 = vmatpush.msra.mxu0 0.0
          %304 = vmatpush.msra.mxu0 0.0
          %305 = vmatpush.msra.mxu0 0.0
          %306 = vmatpush.msra.mxu0 0.0
          %307 = vmatpush.msra.mxu0 0.0
          %308 = vmatpush.msra.mxu0 %v291
          %309 = vmatmul.f32.gmra.mxu0 %v284
          %v310 = vpop.f32.mrf.mxu0
          %v311 = vadd.f32 0.0, %v310
          %312 = vmatmul.f32.gmra.mxu0 %v287
          %v313 = vpop.f32.mrf.mxu0
          %v314 = vadd.f32 0.0, %v313
          %315 = vdwg.mxu0
          %v316 = vpack.c.bf16 %v311, %v311
          %v317 = vpack.c.bf16 %v314, %v314
          %318 = vst [vmem:[#allocation2] sm:$0xf] %v316
          %319 = vst [vmem:[#allocation2 + $0x4] sm:$0xf] %v317
          %v320 = vld [vmem:[%s3] sm:$0x7]
          %v321 = vld [vmem:[%s4] sm:$0x1]
          %v323 = vperm.slane %v321, 0
          %v326 = vsel %vm289, %v320, 0
          %328 = vmatpush.msra.mxu0 0.0
          %329 = vmatpush.msra.mxu0 0.0
          %330 = vmatpush.msra.mxu0 0.0
          %331 = vmatpush.msra.mxu0 0.0
          %332 = vmatpush.msra.mxu0 0.0
          %333 = vmatpush.msra.mxu0 0.0
          %334 = vmatpush.msra.mxu0 0.0
          %335 = vmatpush.msra.mxu0 0.0
          %336 = vmatpush.msra.mxu0 0.0
          %337 = vmatpush.msra.mxu0 0.0
          %338 = vmatpush.msra.mxu0 0.0
          %339 = vmatpush.msra.mxu0 0.0
          %340 = vmatpush.msra.mxu0 0.0
          %341 = vmatpush.msra.mxu0 0.0
          %342 = vmatpush.msra.mxu0 0.0
          %343 = vmatpush.msra.mxu0 %v326
          %344 = vmatmul.f32.gmra.mxu0 %v284
          %v345 = vpop.f32.mrf.mxu0
          %v346 = vadd.f32 %v323, %v345
          %347 = vmatmul.f32.gmra.mxu0 %v287
          %v348 = vpop.f32.mrf.mxu0
          %v349 = vadd.f32 %v323, %v348
          %350 = vdwg.mxu0
          %351 = vst [vmem:[#allocation3] sm:$0xff] %v346
          %352 = vst [vmem:[#allocation3 + $0x8] sm:$0xff] %v349
        $region44: #{tpu_custom_call.1} parent=39 // pred_fallthru
          _
        %v353 = vld [vmem:[%s271] sm:$0xff]
        %v354 = vld [vmem:[%s271 + $0x8] sm:$0xff]
        %v355 = vlaneseq
        %v356 = vand.u32 %v355, 127
        %v357 = vld [vmem:[#allocation2] sm:$0xf]
        %v358 = vld [vmem:[#allocation2 + $0x4] sm:$0xf]
        %359 = vset.pattern.permute.xlu0 0
        %360 = vperm.xlu0 %359, %v353
        %v361 = vpop.permute.xlu0 %360
        %362 = vset.pattern.permute.xlu0 0
        %363 = vperm.xlu0 %362, %v354
        %v364 = vpop.permute.xlu0 %363
        %vm365 = vcmp.eq.s32.totalorder %v361, %v356
        %vm366 = vcmp.eq.s32.totalorder %v364, %v356
        %v367 = vsel %vm365, 1, 0
        %v368 = vsel %vm366, 1, 0
        %v369 = vcvt.s32.f32 %v367
        %v370 = vcvt.s32.f32 %v368
        %v371 = vpack.c.bf16 %v369, %v369
        %v372 = vpack.c.bf16 %v370, %v370
        %373 = vset.pattern.permute.xlu0 1
        %374 = vperm.xlu0 %373, %v353
        %v375 = vpop.permute.xlu0 %374
        %376 = vset.pattern.permute.xlu0 1
        %377 = vperm.xlu0 %376, %v354
        %v378 = vpop.permute.xlu0 %377
        %vm379 = vcmp.eq.s32.totalorder %v375, %v356
        %vm380 = vcmp.eq.s32.totalorder %v378, %v356
        %v381 = vsel %vm379, 1, 0
        %v382 = vsel %vm380, 1, 0
        %v383 = vcvt.s32.f32 %v381
        %v384 = vcvt.s32.f32 %v382
        %v385 = vpack.c.bf16 %v383, %v383
        %v386 = vpack.c.bf16 %v384, %v384
        %387 = vset.pattern.permute.xlu0 2
        %388 = vperm.xlu0 %387, %v353
        %v389 = vpop.permute.xlu0 %388
        %390 = vset.pattern.permute.xlu0 2
        %391 = vperm.xlu0 %390, %v354
        %v392 = vpop.permute.xlu0 %391
        %vm393 = vcmp.eq.s32.totalorder %v389, %v356
        %vm394 = vcmp.eq.s32.totalorder %v392, %v356
        %v395 = vsel %vm393, 1, 0
        %v396 = vsel %vm394, 1, 0
        %v397 = vcvt.s32.f32 %v395
        %v398 = vcvt.s32.f32 %v396
        %v399 = vpack.c.bf16 %v397, %v397
        %v400 = vpack.c.bf16 %v398, %v398
        %401 = vset.pattern.permute.xlu0 3
        %402 = vperm.xlu0 %401, %v353
        %v403 = vpop.permute.xlu0 %402
        %404 = vset.pattern.permute.xlu0 3
        %405 = vperm.xlu0 %404, %v354
        %v406 = vpop.permute.xlu0 %405
        %vm407 = vcmp.eq.s32.totalorder %v403, %v356
        %vm408 = vcmp.eq.s32.totalorder %v406, %v356
        %v409 = vsel %vm407, 1, 0
        %v410 = vsel %vm408, 1, 0
        %v411 = vcvt.s32.f32 %v409
        %v412 = vcvt.s32.f32 %v410
        %v413 = vpack.c.bf16 %v411, %v411
        %v414 = vpack.c.bf16 %v412, %v412
        %415 = vset.pattern.permute.xlu0 4
        %416 = vperm.xlu0 %415, %v353
        %v417 = vpop.permute.xlu0 %416
        %418 = vset.pattern.permute.xlu0 4
        %419 = vperm.xlu0 %418, %v354
        %v420 = vpop.permute.xlu0 %419
        %vm421 = vcmp.eq.s32.totalorder %v417, %v356
        %vm422 = vcmp.eq.s32.totalorder %v420, %v356
        %v423 = vsel %vm421, 1, 0
        %v424 = vsel %vm422, 1, 0
        %v425 = vcvt.s32.f32 %v423
        %v426 = vcvt.s32.f32 %v424
        %v427 = vpack.c.bf16 %v425, %v425
        %v428 = vpack.c.bf16 %v426, %v426
        %429 = vset.pattern.permute.xlu0 5
        %430 = vperm.xlu0 %429, %v353
        %v431 = vpop.permute.xlu0 %430
        %432 = vset.pattern.permute.xlu0 5
        %433 = vperm.xlu0 %432, %v354
        %v434 = vpop.permute.xlu0 %433
        %vm435 = vcmp.eq.s32.totalorder %v431, %v356
        %vm436 = vcmp.eq.s32.totalorder %v434, %v356
        %v437 = vsel %vm435, 1, 0
        %v438 = vsel %vm436, 1, 0
        %v439 = vcvt.s32.f32 %v437
        %v440 = vcvt.s32.f32 %v438
        %v441 = vpack.c.bf16 %v439, %v439
        %v442 = vpack.c.bf16 %v440, %v440
        %443 = vset.pattern.permute.xlu0 6
        %444 = vperm.xlu0 %443, %v353
        %v445 = vpop.permute.xlu0 %444
        %446 = vset.pattern.permute.xlu0 6
        %447 = vperm.xlu0 %446, %v354
        %v448 = vpop.permute.xlu0 %447
        %vm449 = vcmp.eq.s32.totalorder %v445, %v356
        %vm450 = vcmp.eq.s32.totalorder %v448, %v356
        %v451 = vsel %vm449, 1, 0
        %v452 = vsel %vm450, 1, 0
        %v453 = vcvt.s32.f32 %v451
        %v454 = vcvt.s32.f32 %v452
        %v455 = vpack.c.bf16 %v453, %v453
        %v456 = vpack.c.bf16 %v454, %v454
        %457 = vset.pattern.permute.xlu0 7
        %458 = vperm.xlu0 %457, %v353
        %v459 = vpop.permute.xlu0 %458
        %460 = vset.pattern.permute.xlu0 7
        %461 = vperm.xlu0 %460, %v354
        %v462 = vpop.permute.xlu0 %461
        %vm463 = vcmp.eq.s32.totalorder %v459, %v356
        %vm464 = vcmp.eq.s32.totalorder %v462, %v356
        %v465 = vsel %vm463, 1, 0
        %v466 = vsel %vm464, 1, 0
        %v467 = vcvt.s32.f32 %v465
        %v468 = vcvt.s32.f32 %v466
        %v469 = vpack.c.bf16 %v467, %v467
        %v470 = vpack.c.bf16 %v468, %v468
        %v473 = vunpack.c.l.b16 %v371
        %v474 = vunpack.c.l.b16 %v372
        %v475 = vpack.c.b16 %v474, %v473
        %v478 = vunpack.c.l.b16 %v385
        %v479 = vunpack.c.l.b16 %v386
        %v480 = vpack.c.b16 %v479, %v478
        %v483 = vunpack.c.l.b16 %v399
        %v484 = vunpack.c.l.b16 %v400
        %v485 = vpack.c.b16 %v484, %v483
        %v488 = vunpack.c.l.b16 %v413
        %v489 = vunpack.c.l.b16 %v414
        %v490 = vpack.c.b16 %v489, %v488
        %v493 = vunpack.c.l.b16 %v427
        %v494 = vunpack.c.l.b16 %v428
        %v495 = vpack.c.b16 %v494, %v493
        %v498 = vunpack.c.l.b16 %v441
        %v499 = vunpack.c.l.b16 %v442
        %v500 = vpack.c.b16 %v499, %v498
        %v503 = vunpack.c.l.b16 %v455
        %v504 = vunpack.c.l.b16 %v456
        %v505 = vpack.c.b16 %v504, %v503
        %v508 = vunpack.c.l.b16 %v469
        %v509 = vunpack.c.l.b16 %v470
        %v510 = vpack.c.b16 %v509, %v508
        %v513 = vunpack.c.l.b16 %v357
        %v514 = vunpack.c.l.b16 %v358
        %v515 = vpack.c.b16 %v514, %v513
        %vm517 = vcmask 130048
        %v519 = vsel %vm517, %v475, 0
        %v522 = vsel %vm517, %v480, 0
        %v525 = vsel %vm517, %v485, 0
        %v528 = vsel %vm517, %v490, 0
        %v531 = vsel %vm517, %v495, 0
        %v534 = vsel %vm517, %v500, 0
        %v537 = vsel %vm517, %v505, 0
        %v540 = vsel %vm517, %v510, 0
        %542 = vmatpush.bf16.msra.mxu0 0
        %543 = vmatpush.bf16.msra.mxu0 0
        %544 = vmatpush.bf16.msra.mxu0 0
        %545 = vmatpush.bf16.msra.mxu0 0
        %546 = vmatpush.bf16.msra.mxu0 0
        %547 = vmatpush.bf16.msra.mxu0 0
        %548 = vmatpush.bf16.msra.mxu0 0
        %549 = vmatpush.bf16.msra.mxu0 %v515
        %550 = vmatmul.bf16.gmra.mxu0 %v519
        %v551 = vpop.f32.mrf.mxu0
        %v552 = vadd.f32 0.0, %v551
        %v553 = vpop.f32.mrf.mxu0
        %v554 = vadd.f32 0.0, %v553
        %555 = vmatmul.bf16.gmra.mxu0 %v522
        %v556 = vpop.f32.mrf.mxu0
        %v557 = vadd.f32 0.0, %v556
        %v558 = vpop.f32.mrf.mxu0
        %v559 = vadd.f32 0.0, %v558
        %560 = vmatmul.bf16.gmra.mxu0 %v525
        %v561 = vpop.f32.mrf.mxu0
        %v562 = vadd.f32 0.0, %v561
        %v563 = vpop.f32.mrf.mxu0
        %v564 = vadd.f32 0.0, %v563
        %565 = vmatmul.bf16.gmra.mxu0 %v528
        %v566 = vpop.f32.mrf.mxu0
        %v567 = vadd.f32 0.0, %v566
        %v568 = vpop.f32.mrf.mxu0
        %v569 = vadd.f32 0.0, %v568
        %570 = vmatmul.bf16.gmra.mxu0 %v531
        %v571 = vpop.f32.mrf.mxu0
        %v572 = vadd.f32 0.0, %v571
        %v573 = vpop.f32.mrf.mxu0
        %v574 = vadd.f32 0.0, %v573
        %575 = vmatmul.bf16.gmra.mxu0 %v534
        %v576 = vpop.f32.mrf.mxu0
        %v577 = vadd.f32 0.0, %v576
        %v578 = vpop.f32.mrf.mxu0
        %v579 = vadd.f32 0.0, %v578
        %580 = vmatmul.bf16.gmra.mxu0 %v537
        %v581 = vpop.f32.mrf.mxu0
        %v582 = vadd.f32 0.0, %v581
        %v583 = vpop.f32.mrf.mxu0
        %v584 = vadd.f32 0.0, %v583
        %585 = vmatmul.bf16.gmra.mxu0 %v540
        %v586 = vpop.f32.mrf.mxu0
        %v587 = vadd.f32 0.0, %v586
        %v588 = vpop.f32.mrf.mxu0
        %v589 = vadd.f32 0.0, %v588
        %590 = vdwg.mxu0
        %v591 = vmax.f32 %v552, %v557
        %v592 = vmax.f32 %v554, %v559
        %v593 = vmax.f32 %v591, %v562
        %v594 = vmax.f32 %v592, %v564
        %v595 = vmax.f32 %v593, %v567
        %v596 = vmax.f32 %v594, %v569
        %v597 = vmax.f32 %v595, %v572
        %v598 = vmax.f32 %v596, %v574
        %v599 = vmax.f32 %v597, %v577
        %v600 = vmax.f32 %v598, %v579
        %v601 = vmax.f32 %v599, %v582
        %v602 = vmax.f32 %v600, %v584
        %v603 = vmax.f32 %v601, %v587
        %v604 = vmax.f32 %v602, %v589
        %s605 = smul.u32 %s24, 16
        %s606 = scalar_lea.vmem [#allocation3], %s605
        %v607 = vld [vmem:[%s606] sm:$0xff]
        %v608 = vld [vmem:[%s606 + $0x8] sm:$0xff]
        %v609 = vadd.f32 %v603, %v607
        %v610 = vadd.f32 %v604, %v608
        %vm611 = vcmp.gt.f32.partialorder %v609, 0.0
        %vm612 = vcmp.gt.f32.partialorder %v610, 0.0
        %v613 = vmul.f32 %v609, 0.2
        %v614 = vmul.f32 %v610, 0.2
        %v615 = vsel %vm611, %v609, %v613
        %v616 = vsel %vm612, %v610, %v614
        %617 = vst [vmem:[%s257] sm:$0xff] %v615
        %618 = vst [vmem:[%s257 + $0x8] sm:$0xff] %v616
        %s619 = sand.u32 %s158, 1
        %s620 = scalar_lea.sflag [#allocation5], %s619
        %s621 = sand.u32 %s158, 1
        %s622 = smul.addr %s621, 16
        %s623 = scalar_lea.vmem [#allocation4], %s622
        // Predicated region
        $region45: #{tpu_custom_call.1} parent=39 // pred_check
          %p624 = pneg %p168
        $region46: #{tpu_custom_call.1} parent=39 // pred_check_branch
          %626 = sbr.rel (%p624) target = $region48
        $region47: #{tpu_custom_call.1} parent=39 // pred_region
          %s627 = smul.u32 2, %s24
          %629 = vsyncadd %s620, 0
          %s630 = smul.addr %s23, 2
          %s631 = sadd.s32 %s627, %s630
          %s632 = smul.addr %s631, 8
          %s633 = scalar_lea.hbm %s5, %s632
          %s634 = sshll.u32 %s623, 4
          %s635 = int_to_ptr.vmem [resolvable:$true] %s634
          %s636 = sshll.u32 %s633, 4
          %s637 = int_to_ptr.hbm [resolvable:$true] %s636
          %642 = dma.vmem_to_hbm [thread:$0]  %s635, 256, %s637, %s620, 128, 128, 8
        $region48: #{tpu_custom_call.1} parent=39 // pred_fallthru
          _
      $region40: #{tpu_custom_call.1} parent=5 // pred_fallthru
        _
      %p643 = scmp.le.s32.totalorder 2, %s14
      // Predicated region
      $region49: #{tpu_custom_call.1} parent=5 // pred_check
        %p644 = pneg %p643
      $region50: #{tpu_custom_call.1} parent=5 // pred_check_branch
        %646 = sbr.rel (%p644) target = $region52
      $region51: #{tpu_custom_call.1} parent=5 // pred_region
        %s647 = ssub.s32 %s14, 2
        // Predicated region
        $region53: #{tpu_custom_call.1} parent=51 // pred_check
          %p648 = pneg %p174
        $region54: #{tpu_custom_call.1} parent=51 // pred_check_branch
          %650 = sbr.rel (%p648) target = $region56
        $region55: #{tpu_custom_call.1} parent=51 // pred_region
          %s651 = sand.u32 %s159, 1
          %s652 = scalar_lea.sflag [#allocation5], %s651
          %s653 = sand.u32 %s159, 1
          %s654 = smul.addr %s653, 16
          %s655 = scalar_lea.vmem [#allocation4], %s654
          %657 = dma.done %s652, 256
        $region56: #{tpu_custom_call.1} parent=51 // pred_fallthru
          _
      $region52: #{tpu_custom_call.1} parent=5 // pred_fallthru
        _
    $region6: #{tpu_custom_call.1} parent=1 // loop_footer
      %s18 = sadd.s32 1, %s14
    $region7: #{tpu_custom_call.1} parent=1 // loop_footer_branch
      %13 = sbr.rel target = $region3
    $region8: #{tpu_custom_call.1} parent=1 // loop_exit
      _
    %658 = vsyncpa [#allocation5], 1
    %s659 = scalar_lea.sflag [#allocation5], 1
    %660 = vsyncpa %s659, 1

</llo_original>
